<compile_context>
chip_gen: v6e
topology: v6e:2x2x1
jax: 0.10.0
libtpu: 0.0.40
codegen_flags: <defaults>
</compile_context>

<pallas_src>
import jax
import jax.numpy as jnp
from jax.experimental import pallas as pl
from jax.experimental.pallas import tpu as pltpu

HIDDEN_DIMS = (256, 184, 128, 64)   # nn.Linear(F,256) -> 184 -> 128 -> 64
H1 = HIDDEN_DIMS[0]                 # per-head width after layer 1
LAST = HIDDEN_DIMS[-1]              # 64 per head
OUT_DIM = 2 * LAST                  # 128, lane-dense fused output width


def _round_up(n, m):
    return ((n + m - 1) // m) * m


# --------------------------------------------------------------------------
# Kernel: fused 4-layer, 2-head MLP.  bf16 matmuls, f32 accumulation,
# f32 bias+ReLU, bf16 inter-layer activations, f32 output.
# --------------------------------------------------------------------------
def _fused_mlp_kernel(x_ref, w1, b1, w2s, b2s, w3s, b3s, w4s, b4s, out_ref):
    x = x_ref[...]                                                   # bf16 (bm, F)

    # Layer 1: both heads fused along N -> one dense [F, 512] matmul.
    a1 = jnp.dot(x, w1[...], preferred_element_type=jnp.float32)
    h1 = jnp.maximum(a1 + b1[...], 0.0).astype(jnp.bfloat16)         # (bm, 512)
    hp, hv = h1[:, :H1], h1[:, H1:]                                  # lane-aligned slices

    # Layers 2-4: per-head dots (no zero-padded block diagonal).
    heads = ((w2s, b2s), (w3s, b3s), (w4s, b4s))
    for li, (w_ref, b_ref) in enumerate(heads):
        ap = jnp.dot(hp, w_ref[0], preferred_element_type=jnp.float32)
        av = jnp.dot(hv, w_ref[1], preferred_element_type=jnp.float32)
        hp = jnp.maximum(ap + b_ref[0], 0.0)                         # f32 bias + ReLU
        hv = jnp.maximum(av + b_ref[1], 0.0)
        if li + 1 < len(heads):            # keep inter-layer activations bf16
            hp = hp.astype(jnp.bfloat16)
            hv = hv.astype(jnp.bfloat16)

    out_ref[...] = jnp.concatenate([hp, hv], axis=-1).astype(out_ref.dtype)


# --------------------------------------------------------------------------
# One-time parameter packing (call at parameter-load time, NOT per forward).
# --------------------------------------------------------------------------
def pack_params(policy_params, value_params):
    """Fuse the two heads: layer-1 column concat, layers 2-4 stacked per-head."""
    (pw1, pb1), (pw2, pb2), (pw3, pb3), (pw4, pb4) = policy_params
    (vw1, vb1), (vw2, vb2), (vw3, vb3), (vw4, vb4) = value_params

    w1 = jnp.concatenate([pw1, vw1], axis=1).astype(jnp.bfloat16)    # [F, 512]
    b1 = jnp.concatenate([pb1, vb1], axis=1).astype(jnp.float32)     # [1, 512]
    w2s = jnp.stack([pw2, vw2]).astype(jnp.bfloat16)                 # [2, 256, 184]
    b2s = jnp.stack([pb2, vb2]).astype(jnp.float32)                  # [2, 1, 184]
    w3s = jnp.stack([pw3, vw3]).astype(jnp.bfloat16)                 # [2, 184, 128]
    b3s = jnp.stack([pb3, vb3]).astype(jnp.float32)                  # [2, 1, 128]
    w4s = jnp.stack([pw4, vw4]).astype(jnp.bfloat16)                 # [2, 128, 64]
    b4s = jnp.stack([pb4, vb4]).astype(jnp.float32)                  # [2, 1, 64]
    return (w1, b1, w2s, b2s, w3s, b3s, w4s, b4s)


# --------------------------------------------------------------------------
# Forward wrapper
# --------------------------------------------------------------------------
@jax.jit
def actor_critic_forward(features, packed):
    """features: [B, F] f32.  packed: output of pack_params().

    Returns (latent_pi, latent_vf), each [B, 64] f32.
    """
    B, F = features.shape

    # Batch tiling: pad B to a sublane multiple; <=512 rows/block, and at
    # least 2 grid steps when B allows it (engages both TCs on v7x).
    B_pad = _round_up(B, 8)
    if B_pad <= 8:
        bm = B_pad
    else:
        n_steps = max(2, -(-B_pad // 512))
        bm = min(512, _round_up(-(-B_pad // n_steps), 8))
        B_pad = _round_up(B_pad, bm)
    if B_pad != B:
        features = jnp.pad(features, ((0, B_pad - B), (0, 0)))
    x = features.astype(jnp.bfloat16)     # halves the per-step input tile DMA
    grid = (B_pad // bm,)

    def resident(shape):                  # weights/biases resident in VMEM
        zeros = (0,) * len(shape)
        return pl.BlockSpec(shape, lambda i, z=zeros: z)

    in_specs = [pl.BlockSpec((bm, F), lambda i: (i, 0))]
    in_specs += [resident(p.shape) for p in packed]
    out_spec = pl.BlockSpec((bm, OUT_DIM), lambda i: (i, 0))

    fused = pl.pallas_call(
        _fused_mlp_kernel,
        out_shape=jax.ShapeDtypeStruct((B_pad, OUT_DIM), jnp.float32),
        grid=grid,
        in_specs=in_specs,
        out_specs=out_spec,
        compiler_params=pltpu.CompilerParams(
            dimension_semantics=("parallel",)),   # megacore over batch tiles
    )(x, *packed)

    # Padded rows (if any) compute ReLU(bias) garbage and are sliced off here.
    latent_pi = fused[:B, :LAST]
    latent_vf = fused[:B, LAST:]
    return latent_pi, latent_vf


# --------------------------------------------------------------------------
# Param init (PyTorch nn.Linear-style uniform) and references
# --------------------------------------------------------------------------
def init_mlp_params(key, feature_dim, hidden_dims=HIDDEN_DIMS):
    """Weights stored as [in, out], biases as [1, out], f32."""
    params = []
    dims = (feature_dim,) + tuple(hidden_dims)
    for i in range(len(hidden_dims)):
        key, kw, kb = jax.random.split(key, 3)
        fan_in, fan_out = dims[i], dims[i + 1]
        bound = 1.0 / jnp.sqrt(fan_in)
        w = jax.random.uniform(kw, (fan_in, fan_out), jnp.float32, -bound, bound)
        b = jax.random.uniform(kb, (1, fan_out), jnp.float32, -bound, bound)
        params.append((w, b))
    return params, key


def reference_forward_f32(features, policy_params, value_params):
    """Pure f32 reference = original PyTorch module semantics."""
    def mlp(h, params):
        for w, b in params:
            h = jnp.maximum(h @ w + b, 0.0)
        return h
    return mlp(features, policy_params), mlp(features, value_params)


def reference_forward_mixed(features, policy_params, value_params):
    """Mirrors the kernel's precision: bf16 operands/activations, f32 acc,
    f32 bias+ReLU, last layer kept in f32."""
    def mlp(x, params):
        h = x.astype(jnp.bfloat16)
        n = len(params)
        for i, (w, b) in enumerate(params):
            acc = jnp.dot(h, w.astype(jnp.bfloat16),
                          preferred_element_type=jnp.float32)
            h = jnp.maximum(acc + b, 0.0)
            if i + 1 < n:
                h = h.astype(jnp.bfloat16)
        return h
    return mlp(features, policy_params), mlp(features, value_params)


if __name__ == "__main__":
    key = jax.random.PRNGKey(0)

    batch = 8
    feature_dim = 32

    key, kx = jax.random.split(key)
    features = jax.random.normal(kx, (batch, feature_dim), jnp.float32)

    policy_params, key = init_mlp_params(key, feature_dim)
    value_params, key = init_mlp_params(key, feature_dim)

    # Pack ONCE (at parameter-load time); the jitted forward reuses the result.
    packed = pack_params(policy_params, value_params)
    packed = jax.block_until_ready(packed)

    latent_pi, latent_vf = actor_critic_forward(features, packed)
    jax.block_until_ready((latent_pi, latent_vf))

    assert latent_pi.shape == (batch, LAST)
    assert latent_vf.shape == (batch, LAST)

    # Tight check vs a reference that mirrors the kernel's mixed precision.
    mp_pi, mp_vf = reference_forward_mixed(features, policy_params, value_params)
    assert jnp.allclose(latent_pi, mp_pi, atol=2e-3, rtol=2e-3)
    assert jnp.allclose(latent_vf, mp_vf, atol=2e-3, rtol=2e-3)

    # Loose check vs the full-f32 reference: the gap is expected bf16 rounding
    # (deliberate precision choice), not kernel error.
    f32_pi, f32_vf = reference_forward_f32(features, policy_params, value_params)
    assert jnp.allclose(latent_pi, f32_pi, atol=5e-2, rtol=5e-2)
    assert jnp.allclose(latent_vf, f32_vf, atol=5e-2, rtol=5e-2)

    print("KERNEL_OK")
</pallas_src>

<mosaic_0001>
module attributes {stable_mosaic.version = 11 : i64} {
  func.func @_fused_mlp_kernel(%arg0: i32, %arg1: memref<8x32xbf16, #tpu.memory_space<vmem>>, %arg2: memref<32x512xbf16, #tpu.memory_space<vmem>>, %arg3: memref<1x512xf32, #tpu.memory_space<vmem>>, %arg4: memref<2x256x184xbf16, #tpu.memory_space<vmem>>, %arg5: memref<2x1x184xf32, #tpu.memory_space<vmem>>, %arg6: memref<2x184x128xbf16, #tpu.memory_space<vmem>>, %arg7: memref<2x1x128xf32, #tpu.memory_space<vmem>>, %arg8: memref<2x128x64xbf16, #tpu.memory_space<vmem>>, %arg9: memref<2x1x64xf32, #tpu.memory_space<vmem>>, %arg10: memref<8x128xf32, #tpu.memory_space<vmem>>) attributes {dimension_semantics = [#tpu.dimension_semantics<parallel>], iteration_bounds = array<i64: 1>, scalar_prefetch = 0 : i64, scratch_operands = 0 : i64, tpu.core_type = #tpu.core_type<tc>, window_params = [{transform_indices = @transform_0, window_bounds = array<i64: 8, 32>}, {pipeline_mode = #tpu.pipeline_mode<synchronous>, transform_indices = @transform_1, window_bounds = array<i64: 32, 512>}, {pipeline_mode = #tpu.pipeline_mode<synchronous>, transform_indices = @transform_2, window_bounds = array<i64: 1, 512>}, {pipeline_mode = #tpu.pipeline_mode<synchronous>, transform_indices = @transform_3, window_bounds = array<i64: 2, 256, 184>}, {pipeline_mode = #tpu.pipeline_mode<synchronous>, transform_indices = @transform_4, window_bounds = array<i64: 2, 1, 184>}, {pipeline_mode = #tpu.pipeline_mode<synchronous>, transform_indices = @transform_5, window_bounds = array<i64: 2, 184, 128>}, {pipeline_mode = #tpu.pipeline_mode<synchronous>, transform_indices = @transform_6, window_bounds = array<i64: 2, 1, 128>}, {pipeline_mode = #tpu.pipeline_mode<synchronous>, transform_indices = @transform_7, window_bounds = array<i64: 2, 128, 64>}, {pipeline_mode = #tpu.pipeline_mode<synchronous>, transform_indices = @transform_8, window_bounds = array<i64: 2, 1, 64>}, {transform_indices = @transform_9, window_bounds = array<i64: 8, 128>}]} {
    %c0 = arith.constant 0 : index
    %c0_0 = arith.constant 0 : index
    %0 = vector.load %arg1[%c0, %c0_0] : memref<8x32xbf16, #tpu.memory_space<vmem>>, vector<8x32xbf16>
    %c0_1 = arith.constant 0 : index
    %c0_2 = arith.constant 0 : index
    %1 = vector.load %arg2[%c0_1, %c0_2] : memref<32x512xbf16, #tpu.memory_space<vmem>>, vector<32x512xbf16>
    %cst = arith.constant dense<0.000000e+00> : vector<8x512xf32>
    %2 = tpu.matmul %0, %1, %cst {dimension_numbers = #tpu.dot_dimension_numbers<[1], [0], [0], [1], [0, 0, 1, 1], [], []>} : vector<8x32xbf16>, vector<32x512xbf16>, vector<8x512xf32> -> vector<8x512xf32>
    %c0_3 = arith.constant 0 : index
    %c0_4 = arith.constant 0 : index
    %3 = vector.load %arg3[%c0_3, %c0_4] : memref<1x512xf32, #tpu.memory_space<vmem>>, vector<1x512xf32>
    %4 = vector.broadcast %3 : vector<1x512xf32> to vector<8x512xf32>
    %5 = arith.addf %2, %4 : vector<8x512xf32>
    %cst_5 = arith.constant 0.000000e+00 : f32
    %6 = vector.broadcast %cst_5 : f32 to vector<8x512xf32>
    %7 = arith.maximumf %5, %6 : vector<8x512xf32>
    %8 = arith.truncf %7 : vector<8x512xf32> to vector<8x512xbf16>
    %9 = vector.extract_strided_slice %8 {offsets = [0, 0], sizes = [8, 256], strides = [1, 1]} : vector<8x512xbf16> to vector<8x256xbf16>
    %10 = vector.extract_strided_slice %8 {offsets = [0, 256], sizes = [8, 256], strides = [1, 1]} : vector<8x512xbf16> to vector<8x256xbf16>
    %c0_6 = arith.constant 0 : index
    %c0_7 = arith.constant 0 : index
    %c0_8 = arith.constant 0 : index
    %11 = vector.load %arg4[%c0_6, %c0_7, %c0_8] : memref<2x256x184xbf16, #tpu.memory_space<vmem>>, vector<1x256x184xbf16>
    %12 = vector.shape_cast %11 : vector<1x256x184xbf16> to vector<256x184xbf16>
    %cst_9 = arith.constant dense<0.000000e+00> : vector<8x184xf32>
    %13 = tpu.matmul %9, %12, %cst_9 {dimension_numbers = #tpu.dot_dimension_numbers<[1], [0], [0], [1], [0, 0, 1, 1], [], []>} : vector<8x256xbf16>, vector<256x184xbf16>, vector<8x184xf32> -> vector<8x184xf32>
    %c1 = arith.constant 1 : index
    %c0_10 = arith.constant 0 : index
    %c0_11 = arith.constant 0 : index
    %14 = vector.load %arg4[%c1, %c0_10, %c0_11] : memref<2x256x184xbf16, #tpu.memory_space<vmem>>, vector<1x256x184xbf16>
    %15 = vector.shape_cast %14 : vector<1x256x184xbf16> to vector<256x184xbf16>
    %cst_12 = arith.constant dense<0.000000e+00> : vector<8x184xf32>
    %16 = tpu.matmul %10, %15, %cst_12 {dimension_numbers = #tpu.dot_dimension_numbers<[1], [0], [0], [1], [0, 0, 1, 1], [], []>} : vector<8x256xbf16>, vector<256x184xbf16>, vector<8x184xf32> -> vector<8x184xf32>
    %c0_13 = arith.constant 0 : index
    %c0_14 = arith.constant 0 : index
    %c0_15 = arith.constant 0 : index
    %17 = vector.load %arg5[%c0_13, %c0_14, %c0_15] : memref<2x1x184xf32, #tpu.memory_space<vmem>>, vector<1x1x184xf32>
    %18 = vector.shape_cast %17 : vector<1x1x184xf32> to vector<1x184xf32>
    %19 = vector.broadcast %18 : vector<1x184xf32> to vector<8x184xf32>
    %20 = arith.addf %13, %19 : vector<8x184xf32>
    %cst_16 = arith.constant 0.000000e+00 : f32
    %21 = vector.broadcast %cst_16 : f32 to vector<8x184xf32>
    %22 = arith.maximumf %20, %21 : vector<8x184xf32>
    %c1_17 = arith.constant 1 : index
    %c0_18 = arith.constant 0 : index
    %c0_19 = arith.constant 0 : index
    %23 = vector.load %arg5[%c1_17, %c0_18, %c0_19] : memref<2x1x184xf32, #tpu.memory_space<vmem>>, vector<1x1x184xf32>
    %24 = vector.shape_cast %23 : vector<1x1x184xf32> to vector<1x184xf32>
    %25 = vector.broadcast %24 : vector<1x184xf32> to vector<8x184xf32>
    %26 = arith.addf %16, %25 : vector<8x184xf32>
    %cst_20 = arith.constant 0.000000e+00 : f32
    %27 = vector.broadcast %cst_20 : f32 to vector<8x184xf32>
    %28 = arith.maximumf %26, %27 : vector<8x184xf32>
    %29 = arith.truncf %22 : vector<8x184xf32> to vector<8x184xbf16>
    %30 = arith.truncf %28 : vector<8x184xf32> to vector<8x184xbf16>
    %c0_21 = arith.constant 0 : index
    %c0_22 = arith.constant 0 : index
    %c0_23 = arith.constant 0 : index
    %31 = vector.load %arg6[%c0_21, %c0_22, %c0_23] : memref<2x184x128xbf16, #tpu.memory_space<vmem>>, vector<1x184x128xbf16>
    %32 = vector.shape_cast %31 : vector<1x184x128xbf16> to vector<184x128xbf16>
    %cst_24 = arith.constant dense<0.000000e+00> : vector<8x128xf32>
    %33 = tpu.matmul %29, %32, %cst_24 {dimension_numbers = #tpu.dot_dimension_numbers<[1], [0], [0], [1], [0, 0, 1, 1], [], []>} : vector<8x184xbf16>, vector<184x128xbf16>, vector<8x128xf32> -> vector<8x128xf32>
    %c1_25 = arith.constant 1 : index
    %c0_26 = arith.constant 0 : index
    %c0_27 = arith.constant 0 : index
    %34 = vector.load %arg6[%c1_25, %c0_26, %c0_27] : memref<2x184x128xbf16, #tpu.memory_space<vmem>>, vector<1x184x128xbf16>
    %35 = vector.shape_cast %34 : vector<1x184x128xbf16> to vector<184x128xbf16>
    %cst_28 = arith.constant dense<0.000000e+00> : vector<8x128xf32>
    %36 = tpu.matmul %30, %35, %cst_28 {dimension_numbers = #tpu.dot_dimension_numbers<[1], [0], [0], [1], [0, 0, 1, 1], [], []>} : vector<8x184xbf16>, vector<184x128xbf16>, vector<8x128xf32> -> vector<8x128xf32>
    %c0_29 = arith.constant 0 : index
    %c0_30 = arith.constant 0 : index
    %c0_31 = arith.constant 0 : index
    %37 = vector.load %arg7[%c0_29, %c0_30, %c0_31] : memref<2x1x128xf32, #tpu.memory_space<vmem>>, vector<1x1x128xf32>
    %38 = vector.shape_cast %37 : vector<1x1x128xf32> to vector<1x128xf32>
    %39 = vector.broadcast %38 : vector<1x128xf32> to vector<8x128xf32>
    %40 = arith.addf %33, %39 : vector<8x128xf32>
    %cst_32 = arith.constant 0.000000e+00 : f32
    %41 = vector.broadcast %cst_32 : f32 to vector<8x128xf32>
    %42 = arith.maximumf %40, %41 : vector<8x128xf32>
    %c1_33 = arith.constant 1 : index
    %c0_34 = arith.constant 0 : index
    %c0_35 = arith.constant 0 : index
    %43 = vector.load %arg7[%c1_33, %c0_34, %c0_35] : memref<2x1x128xf32, #tpu.memory_space<vmem>>, vector<1x1x128xf32>
    %44 = vector.shape_cast %43 : vector<1x1x128xf32> to vector<1x128xf32>
    %45 = vector.broadcast %44 : vector<1x128xf32> to vector<8x128xf32>
    %46 = arith.addf %36, %45 : vector<8x128xf32>
    %cst_36 = arith.constant 0.000000e+00 : f32
    %47 = vector.broadcast %cst_36 : f32 to vector<8x128xf32>
    %48 = arith.maximumf %46, %47 : vector<8x128xf32>
    %49 = arith.truncf %42 : vector<8x128xf32> to vector<8x128xbf16>
    %50 = arith.truncf %48 : vector<8x128xf32> to vector<8x128xbf16>
    %c0_37 = arith.constant 0 : index
    %c0_38 = arith.constant 0 : index
    %c0_39 = arith.constant 0 : index
    %51 = vector.load %arg8[%c0_37, %c0_38, %c0_39] : memref<2x128x64xbf16, #tpu.memory_space<vmem>>, vector<1x128x64xbf16>
    %52 = vector.shape_cast %51 : vector<1x128x64xbf16> to vector<128x64xbf16>
    %cst_40 = arith.constant dense<0.000000e+00> : vector<8x64xf32>
    %53 = tpu.matmul %49, %52, %cst_40 {dimension_numbers = #tpu.dot_dimension_numbers<[1], [0], [0], [1], [0, 0, 1, 1], [], []>} : vector<8x128xbf16>, vector<128x64xbf16>, vector<8x64xf32> -> vector<8x64xf32>
    %c1_41 = arith.constant 1 : index
    %c0_42 = arith.constant 0 : index
    %c0_43 = arith.constant 0 : index
    %54 = vector.load %arg8[%c1_41, %c0_42, %c0_43] : memref<2x128x64xbf16, #tpu.memory_space<vmem>>, vector<1x128x64xbf16>
    %55 = vector.shape_cast %54 : vector<1x128x64xbf16> to vector<128x64xbf16>
    %cst_44 = arith.constant dense<0.000000e+00> : vector<8x64xf32>
    %56 = tpu.matmul %50, %55, %cst_44 {dimension_numbers = #tpu.dot_dimension_numbers<[1], [0], [0], [1], [0, 0, 1, 1], [], []>} : vector<8x128xbf16>, vector<128x64xbf16>, vector<8x64xf32> -> vector<8x64xf32>
    %c0_45 = arith.constant 0 : index
    %c0_46 = arith.constant 0 : index
    %c0_47 = arith.constant 0 : index
    %57 = vector.load %arg9[%c0_45, %c0_46, %c0_47] : memref<2x1x64xf32, #tpu.memory_space<vmem>>, vector<1x1x64xf32>
    %58 = vector.shape_cast %57 : vector<1x1x64xf32> to vector<1x64xf32>
    %59 = vector.broadcast %58 : vector<1x64xf32> to vector<8x64xf32>
    %60 = arith.addf %53, %59 : vector<8x64xf32>
    %cst_48 = arith.constant 0.000000e+00 : f32
    %61 = vector.broadcast %cst_48 : f32 to vector<8x64xf32>
    %62 = arith.maximumf %60, %61 : vector<8x64xf32>
    %c1_49 = arith.constant 1 : index
    %c0_50 = arith.constant 0 : index
    %c0_51 = arith.constant 0 : index
    %63 = vector.load %arg9[%c1_49, %c0_50, %c0_51] : memref<2x1x64xf32, #tpu.memory_space<vmem>>, vector<1x1x64xf32>
    %64 = vector.shape_cast %63 : vector<1x1x64xf32> to vector<1x64xf32>
    %65 = vector.broadcast %64 : vector<1x64xf32> to vector<8x64xf32>
    %66 = arith.addf %56, %65 : vector<8x64xf32>
    %cst_52 = arith.constant 0.000000e+00 : f32
    %67 = vector.broadcast %cst_52 : f32 to vector<8x64xf32>
    %68 = arith.maximumf %66, %67 : vector<8x64xf32>
    %69 = tpu.concatenate %62, %68 in 1 : vector<8x64xf32>, vector<8x64xf32> -> vector<8x128xf32>
    %c0_53 = arith.constant 0 : index
    %c0_54 = arith.constant 0 : index
    %70 = vector.load %arg10[%c0_53, %c0_54] : memref<8x128xf32, #tpu.memory_space<vmem>>, vector<8x128xf32>
    tpu.vector_store %arg10[%c0_53, %c0_54], %69 {strides = array<i32>} : memref<8x128xf32, #tpu.memory_space<vmem>>, vector<8x128xf32>,
    return
  }
  func.func @transform_0(%arg0: i32) -> (i32, i32) {
    %c0_i32 = arith.constant 0 : i32
    %c0_i32_0 = arith.constant 0 : i32
    return %arg0, %c0_i32 : i32, i32
  }
  func.func @transform_1(%arg0: i32) -> (i32, i32) {
    %c0_i32 = arith.constant 0 : i32
    %c0_i32_0 = arith.constant 0 : i32
    %c0_i32_1 = arith.constant 0 : i32
    return %c0_i32, %c0_i32_0 : i32, i32
  }
  func.func @transform_2(%arg0: i32) -> (i32, i32) {
    %c0_i32 = arith.constant 0 : i32
    %c0_i32_0 = arith.constant 0 : i32
    %c0_i32_1 = arith.constant 0 : i32
    return %c0_i32, %c0_i32_0 : i32, i32
  }
  func.func @transform_3(%arg0: i32) -> (i32, i32, i32) {
    %c0_i32 = arith.constant 0 : i32
    %c0_i32_0 = arith.constant 0 : i32
    %c0_i32_1 = arith.constant 0 : i32
    %c0_i32_2 = arith.constant 0 : i32
    return %c0_i32, %c0_i32_0, %c0_i32_1 : i32, i32, i32
  }
  func.func @transform_4(%arg0: i32) -> (i32, i32, i32) {
    %c0_i32 = arith.constant 0 : i32
    %c0_i32_0 = arith.constant 0 : i32
    %c0_i32_1 = arith.constant 0 : i32
    %c0_i32_2 = arith.constant 0 : i32
    return %c0_i32, %c0_i32_0, %c0_i32_1 : i32, i32, i32
  }
  func.func @transform_5(%arg0: i32) -> (i32, i32, i32) {
    %c0_i32 = arith.constant 0 : i32
    %c0_i32_0 = arith.constant 0 : i32
    %c0_i32_1 = arith.constant 0 : i32
    %c0_i32_2 = arith.constant 0 : i32
    return %c0_i32, %c0_i32_0, %c0_i32_1 : i32, i32, i32
  }
  func.func @transform_6(%arg0: i32) -> (i32, i32, i32) {
    %c0_i32 = arith.constant 0 : i32
    %c0_i32_0 = arith.constant 0 : i32
    %c0_i32_1 = arith.constant 0 : i32
    %c0_i32_2 = arith.constant 0 : i32
    return %c0_i32, %c0_i32_0, %c0_i32_1 : i32, i32, i32
  }
  func.func @transform_7(%arg0: i32) -> (i32, i32, i32) {
    %c0_i32 = arith.constant 0 : i32
    %c0_i32_0 = arith.constant 0 : i32
    %c0_i32_1 = arith.constant 0 : i32
    %c0_i32_2 = arith.constant 0 : i32
    return %c0_i32, %c0_i32_0, %c0_i32_1 : i32, i32, i32
  }
  func.func @transform_8(%arg0: i32) -> (i32, i32, i32) {
    %c0_i32 = arith.constant 0 : i32
    %c0_i32_0 = arith.constant 0 : i32
    %c0_i32_1 = arith.constant 0 : i32
    %c0_i32_2 = arith.constant 0 : i32
    return %c0_i32, %c0_i32_0, %c0_i32_1 : i32, i32, i32
  }
  func.func @transform_9(%arg0: i32) -> (i32, i32) {
    %c0_i32 = arith.constant 0 : i32
    %c0_i32_0 = arith.constant 0 : i32
    return %arg0, %c0_i32 : i32, i32
  }
}

</mosaic_0001>

<llo_original>
// kernel: actor_critic_forward.1
$region0: #{actor_critic_forward.1}
  #allocation0 [shape = 'u32[]', space=smem, size = 0x4, offset = 0x4, fixed_abs, tag = 'smem constant byte address 0x4 - core index']
  #allocation1 [shape = 'u32[144,128]{1,0:T(1,128)}', space=vmem, size = 0x12000, scoped, tag = 'internal scratch']
  %s0 = inlined_call_operand.vmem [shape: bf16[8,32], index: 0, kind: input, shape index: {}]
  %s1 = inlined_call_operand.vmem [shape: bf16[32,512], index: 1, kind: input, shape index: {}]
  %s2 = inlined_call_operand.vmem [shape: f32[1,512], index: 2, kind: input, shape index: {}]
  %s3 = inlined_call_operand.vmem [shape: bf16[2,256,184], index: 3, kind: input, shape index: {}]
  %s4 = inlined_call_operand.vmem [shape: f32[2,1,184], index: 4, kind: input, shape index: {}]
  %s5 = inlined_call_operand.vmem [shape: bf16[2,184,128], index: 5, kind: input, shape index: {}]
  %s6 = inlined_call_operand.vmem [shape: f32[2,1,128], index: 6, kind: input, shape index: {}]
  %s7 = inlined_call_operand.vmem [shape: bf16[2,128,64], index: 7, kind: input, shape index: {}]
  %s8 = inlined_call_operand.vmem [shape: f32[2,1,64], index: 8, kind: input, shape index: {}]
  %s9 = inlined_call_operand.vmem [shape: f32[8,128], index: 9, kind: output, shape index: {}]
  %s10 = sld [smem:[#allocation0]]
  $region46: #{actor_critic_forward.1} parent=0
    _
  %s12 = ssub.s32 1, %s10
  %s13 = scalar_select 0, %s12, %s10
  // Predicated region
  $region2: #{actor_critic_forward.1} parent=0 // pred_check
    _
  $region3: #{actor_critic_forward.1} parent=0 // pred_check_branch
    %15 = sbr.rel (0) target = $region5
  $region4: #{actor_critic_forward.1} parent=0 // pred_region
    _
  $region5: #{actor_critic_forward.1} parent=0 // pred_fallthru
    _
  // Predicated region
  $region6: #{actor_critic_forward.1} parent=0 // pred_check
    _
  $region7: #{actor_critic_forward.1} parent=0 // pred_check_branch
    %17 = sbr.rel (0) target = $region9
  $region8: #{actor_critic_forward.1} parent=0 // pred_region
    _
  $region9: #{actor_critic_forward.1} parent=0 // pred_fallthru
    _
  // Predicated region
  $region10: #{actor_critic_forward.1} parent=0 // pred_check
    _
  $region11: #{actor_critic_forward.1} parent=0 // pred_check_branch
    %19 = sbr.rel (0) target = $region13
  $region12: #{actor_critic_forward.1} parent=0 // pred_region
    _
  $region13: #{actor_critic_forward.1} parent=0 // pred_fallthru
    _
  // Predicated region
  $region14: #{actor_critic_forward.1} parent=0 // pred_check
    _
  $region15: #{actor_critic_forward.1} parent=0 // pred_check_branch
    %21 = sbr.rel (0) target = $region17
  $region16: #{actor_critic_forward.1} parent=0 // pred_region
    _
  $region17: #{actor_critic_forward.1} parent=0 // pred_fallthru
    _
  // Predicated region
  $region18: #{actor_critic_forward.1} parent=0 // pred_check
    _
  $region19: #{actor_critic_forward.1} parent=0 // pred_check_branch
    %23 = sbr.rel (0) target = $region21
  $region20: #{actor_critic_forward.1} parent=0 // pred_region
    _
  $region21: #{actor_critic_forward.1} parent=0 // pred_fallthru
    _
  // Predicated region
  $region22: #{actor_critic_forward.1} parent=0 // pred_check
    _
  $region23: #{actor_critic_forward.1} parent=0 // pred_check_branch
    %25 = sbr.rel (0) target = $region25
  $region24: #{actor_critic_forward.1} parent=0 // pred_region
    _
  $region25: #{actor_critic_forward.1} parent=0 // pred_fallthru
    _
  // Predicated region
  $region26: #{actor_critic_forward.1} parent=0 // pred_check
    _
  $region27: #{actor_critic_forward.1} parent=0 // pred_check_branch
    %27 = sbr.rel (0) target = $region29
  $region28: #{actor_critic_forward.1} parent=0 // pred_region
    _
  $region29: #{actor_critic_forward.1} parent=0 // pred_fallthru
    _
  // Predicated region
  $region30: #{actor_critic_forward.1} parent=0 // pred_check
    _
  $region31: #{actor_critic_forward.1} parent=0 // pred_check_branch
    %29 = sbr.rel (0) target = $region33
  $region32: #{actor_critic_forward.1} parent=0 // pred_region
    _
  $region33: #{actor_critic_forward.1} parent=0 // pred_fallthru
    _
  // Predicated region
  $region34: #{actor_critic_forward.1} parent=0 // pred_check
    _
  $region35: #{actor_critic_forward.1} parent=0 // pred_check_branch
    %31 = sbr.rel (0) target = $region37
  $region36: #{actor_critic_forward.1} parent=0 // pred_region
    _
  $region37: #{actor_critic_forward.1} parent=0 // pred_fallthru
    _
  %v33 = vld [vmem:[%s0] sm:$0xf]
  %v34 = vld [vmem:[%s1] sm:$0xff]
  %v35 = vld [vmem:[%s1 + $0x8] sm:$0xff]
  %v36 = vld [vmem:[%s1 + $0x10] sm:$0xff]
  %v37 = vld [vmem:[%s1 + $0x18] sm:$0xff]
  %v38 = vld [vmem:[%s1 + $0x20] sm:$0xff]
  %v39 = vld [vmem:[%s1 + $0x28] sm:$0xff]
  %v40 = vld [vmem:[%s1 + $0x30] sm:$0xff]
  %v41 = vld [vmem:[%s1 + $0x38] sm:$0xff]
  %v42 = vld [vmem:[%s2] sm:$0xf]
  %v44 = vlaneseq
  %v45 = vshrl.u32 %v44, 7
  %v46 = vsub.s32 0, %v45
  %v47 = vrot.slane %v42, %v46
  %v48 = vlaneseq
  %v49 = vshrl.u32 %v48, 7
  %v50 = vsub.s32 1, %v49
  %v51 = vrot.slane %v42, %v50
  %v52 = vlaneseq
  %v53 = vshrl.u32 %v52, 7
  %v54 = vsub.s32 2, %v53
  %v55 = vrot.slane %v42, %v54
  %v56 = vlaneseq
  %v57 = vshrl.u32 %v56, 7
  %v58 = vsub.s32 3, %v57
  %v59 = vrot.slane %v42, %v58
  %v72 = vunpack.c.l.b16 %v34
  %v73 = vunpack.c.h.b16 %v34
  %v74 = vunpack.c.l.b16 %v35
  %v75 = vunpack.c.h.b16 %v35
  %v76 = vunpack.c.l.b16 %v36
  %v77 = vunpack.c.h.b16 %v36
  %v78 = vunpack.c.l.b16 %v37
  %v79 = vunpack.c.h.b16 %v37
  %v80 = vunpack.c.l.b16 %v38
  %v81 = vunpack.c.h.b16 %v38
  %v82 = vunpack.c.l.b16 %v39
  %v83 = vunpack.c.h.b16 %v39
  %v84 = vunpack.c.l.b16 %v40
  %v85 = vunpack.c.h.b16 %v40
  %v86 = vunpack.c.l.b16 %v41
  %v87 = vunpack.c.h.b16 %v41
  %v88 = vpack.c.b16 %v76, %v72
  %v89 = vpack.c.b16 %v77, %v73
  %v90 = vpack.c.b16 %v78, %v74
  %v91 = vpack.c.b16 %v79, %v75
  %v92 = vpack.c.b16 %v84, %v80
  %v93 = vpack.c.b16 %v85, %v81
  %v94 = vpack.c.b16 %v86, %v82
  %v95 = vpack.c.b16 %v87, %v83
  %vm104 = vcmask 261120
  %v106 = vsel %vm104, %v33, 0
  %108 = vmatprep.subr.bf16.mxu0 0
  %109 = vmatpush1.bf16.msra.mxu0 0
  %110 = vmatprep.subr.bf16.mxu0 0
  %111 = vmatpush1.bf16.msra.mxu0 0
  %112 = vmatprep.subr.bf16.mxu0 0
  %113 = vmatpush1.bf16.msra.mxu0 0
  %114 = vmatprep.subr.bf16.mxu0 0
  %115 = vmatpush1.bf16.msra.mxu0 0
  %116 = vmatprep.subr.bf16.mxu0 0
  %117 = vmatpush1.bf16.msra.mxu0 0
  %118 = vmatprep.subr.bf16.mxu0 0
  %119 = vmatpush1.bf16.msra.mxu0 0
  %120 = vmatprep.subr.bf16.mxu0 %v93
  %121 = vmatpush1.bf16.msra.mxu0 %v92
  %122 = vmatprep.subr.bf16.mxu0 %v89
  %123 = vmatpush1.bf16.msra.mxu0 %v88
  %124 = vmatprep.subr.bf16.mxu0 0
  %125 = vmatpush2.bf16.msra.mxu0 0
  %126 = vmatprep.subr.bf16.mxu0 0
  %127 = vmatpush2.bf16.msra.mxu0 0
  %128 = vmatprep.subr.bf16.mxu0 0
  %129 = vmatpush2.bf16.msra.mxu0 0
  %130 = vmatprep.subr.bf16.mxu0 0
  %131 = vmatpush2.bf16.msra.mxu0 0
  %132 = vmatprep.subr.bf16.mxu0 0
  %133 = vmatpush2.bf16.msra.mxu0 0
  %134 = vmatprep.subr.bf16.mxu0 0
  %135 = vmatpush2.bf16.msra.mxu0 0
  %136 = vmatprep.subr.bf16.mxu0 0
  %137 = vmatpush2.bf16.msra.mxu0 0
  %138 = vmatprep.subr.bf16.mxu0 0
  %139 = vmatpush2.bf16.msra.mxu0 0
  %140 = vmatprep.mubr.bf16.mxu0 0
  %141 = vmatmul.mubr.bf16.gmra.mxu0 %v106
  %v142 = vpop.f32.mrf.mxu0
  %v143 = vadd.f32 %v47, %v142
  %v144 = vpop.f32.mrf.mxu0
  %v145 = vadd.f32 %v51, %v144
  %v146 = vpop.f32.mrf.mxu0
  %v147 = vpop.f32.mrf.mxu0
  %148 = vdwg.mxu0
  %149 = vmatprep.subr.bf16.mxu0 0
  %150 = vmatpush1.bf16.msra.mxu0 0
  %151 = vmatprep.subr.bf16.mxu0 0
  %152 = vmatpush1.bf16.msra.mxu0 0
  %153 = vmatprep.subr.bf16.mxu0 0
  %154 = vmatpush1.bf16.msra.mxu0 0
  %155 = vmatprep.subr.bf16.mxu0 0
  %156 = vmatpush1.bf16.msra.mxu0 0
  %157 = vmatprep.subr.bf16.mxu0 0
  %158 = vmatpush1.bf16.msra.mxu0 0
  %159 = vmatprep.subr.bf16.mxu0 0
  %160 = vmatpush1.bf16.msra.mxu0 0
  %161 = vmatprep.subr.bf16.mxu0 %v95
  %162 = vmatpush1.bf16.msra.mxu0 %v94
  %163 = vmatprep.subr.bf16.mxu0 %v91
  %164 = vmatpush1.bf16.msra.mxu0 %v90
  %165 = vmatprep.subr.bf16.mxu0 0
  %166 = vmatpush2.bf16.msra.mxu0 0
  %167 = vmatprep.subr.bf16.mxu0 0
  %168 = vmatpush2.bf16.msra.mxu0 0
  %169 = vmatprep.subr.bf16.mxu0 0
  %170 = vmatpush2.bf16.msra.mxu0 0
  %171 = vmatprep.subr.bf16.mxu0 0
  %172 = vmatpush2.bf16.msra.mxu0 0
  %173 = vmatprep.subr.bf16.mxu0 0
  %174 = vmatpush2.bf16.msra.mxu0 0
  %175 = vmatprep.subr.bf16.mxu0 0
  %176 = vmatpush2.bf16.msra.mxu0 0
  %177 = vmatprep.subr.bf16.mxu0 0
  %178 = vmatpush2.bf16.msra.mxu0 0
  %179 = vmatprep.subr.bf16.mxu0 0
  %180 = vmatpush2.bf16.msra.mxu0 0
  %181 = vmatprep.mubr.bf16.mxu0 0
  %182 = vmatmul.mubr.bf16.gmra.mxu0 %v106
  %v183 = vpop.f32.mrf.mxu0
  %v184 = vadd.f32 %v55, %v183
  %v185 = vpop.f32.mrf.mxu0
  %v186 = vadd.f32 %v59, %v185
  %v187 = vpop.f32.mrf.mxu0
  %v188 = vpop.f32.mrf.mxu0
  %189 = vdwg.mxu0
  %v190 = vmax.f32 %v143, 0.0
  %v191 = vmax.f32 %v145, 0.0
  %v192 = vmax.f32 %v184, 0.0
  %v193 = vmax.f32 %v186, 0.0
  %v194 = vpack.c.bf16 %v190, %v190
  %v195 = vpack.c.bf16 %v191, %v191
  %v196 = vpack.c.bf16 %v192, %v192
  %v197 = vpack.c.bf16 %v193, %v193
  %v198 = vld [vmem:[%s3] sm:$0xff]
  %v199 = vld [vmem:[%s3 + $0x8] sm:$0xff]
  %v200 = vld [vmem:[%s3 + $0x10] sm:$0xff]
  %v201 = vld [vmem:[%s3 + $0x18] sm:$0xff]
  %v202 = vld [vmem:[%s3 + $0x20] sm:$0xff]
  %v203 = vld [vmem:[%s3 + $0x28] sm:$0xff]
  %v204 = vld [vmem:[%s3 + $0x30] sm:$0xff]
  %v205 = vld [vmem:[%s3 + $0x38] sm:$0xff]
  %v206 = vld [vmem:[%s3 + $0x40] sm:$0xff]
  %v207 = vld [vmem:[%s3 + $0x48] sm:$0xff]
  %v208 = vld [vmem:[%s3 + $0x50] sm:$0xff]
  %v209 = vld [vmem:[%s3 + $0x58] sm:$0xff]
  %v210 = vld [vmem:[%s3 + $0x60] sm:$0xff]
  %v211 = vld [vmem:[%s3 + $0x68] sm:$0xff]
  %v212 = vld [vmem:[%s3 + $0x70] sm:$0xff]
  %v213 = vld [vmem:[%s3 + $0x78] sm:$0xff]
  %v214 = vld [vmem:[%s3 + $0x80] sm:$0xff]
  %v215 = vld [vmem:[%s3 + $0x88] sm:$0xff]
  %v216 = vld [vmem:[%s3 + $0x90] sm:$0xff]
  %v217 = vld [vmem:[%s3 + $0x98] sm:$0xff]
  %v218 = vld [vmem:[%s3 + $0xa0] sm:$0xff]
  %v219 = vld [vmem:[%s3 + $0xa8] sm:$0xff]
  %v220 = vld [vmem:[%s3 + $0xb0] sm:$0xff]
  %v221 = vld [vmem:[%s3 + $0xb8] sm:$0xff]
  %v222 = vld [vmem:[%s3 + $0xc0] sm:$0xff]
  %v223 = vld [vmem:[%s3 + $0xc8] sm:$0xff]
  %v224 = vld [vmem:[%s3 + $0xd0] sm:$0xff]
  %v225 = vld [vmem:[%s3 + $0xd8] sm:$0xff]
  %v226 = vld [vmem:[%s3 + $0xe0] sm:$0xff]
  %v227 = vld [vmem:[%s3 + $0xe8] sm:$0xff]
  %v228 = vld [vmem:[%s3 + $0xf0] sm:$0xff]
  %v229 = vld [vmem:[%s3 + $0xf8] sm:$0xff]
  %s230 = scalar_lea.vmem %s3, 256
  %v231 = vld [vmem:[%s230] sm:$0xff]
  %v232 = vld [vmem:[%s230 + $0x8] sm:$0xff]
  %v233 = vld [vmem:[%s230 + $0x10] sm:$0xff]
  %v234 = vld [vmem:[%s230 + $0x18] sm:$0xff]
  %v235 = vld [vmem:[%s230 + $0x20] sm:$0xff]
  %v236 = vld [vmem:[%s230 + $0x28] sm:$0xff]
  %v237 = vld [vmem:[%s230 + $0x30] sm:$0xff]
  %v238 = vld [vmem:[%s230 + $0x38] sm:$0xff]
  %v239 = vld [vmem:[%s230 + $0x40] sm:$0xff]
  %v240 = vld [vmem:[%s230 + $0x48] sm:$0xff]
  %v241 = vld [vmem:[%s230 + $0x50] sm:$0xff]
  %v242 = vld [vmem:[%s230 + $0x58] sm:$0xff]
  %v243 = vld [vmem:[%s230 + $0x60] sm:$0xff]
  %v244 = vld [vmem:[%s230 + $0x68] sm:$0xff]
  %v245 = vld [vmem:[%s230 + $0x70] sm:$0xff]
  %v246 = vld [vmem:[%s230 + $0x78] sm:$0xff]
  %v247 = vld [vmem:[%s230 + $0x80] sm:$0xff]
  %v248 = vld [vmem:[%s230 + $0x88] sm:$0xff]
  %v249 = vld [vmem:[%s230 + $0x90] sm:$0xff]
  %v250 = vld [vmem:[%s230 + $0x98] sm:$0xff]
  %v251 = vld [vmem:[%s230 + $0xa0] sm:$0xff]
  %v252 = vld [vmem:[%s230 + $0xa8] sm:$0xff]
  %v253 = vld [vmem:[%s230 + $0xb0] sm:$0xff]
  %v254 = vld [vmem:[%s230 + $0xb8] sm:$0xff]
  %v255 = vld [vmem:[%s230 + $0xc0] sm:$0xff]
  %v256 = vld [vmem:[%s230 + $0xc8] sm:$0xff]
  %v257 = vld [vmem:[%s230 + $0xd0] sm:$0xff]
  %v258 = vld [vmem:[%s230 + $0xd8] sm:$0xff]
  %v259 = vld [vmem:[%s230 + $0xe0] sm:$0xff]
  %v260 = vld [vmem:[%s230 + $0xe8] sm:$0xff]
  %v261 = vld [vmem:[%s230 + $0xf0] sm:$0xff]
  %v262 = vld [vmem:[%s230 + $0xf8] sm:$0xff]
  %v263 = vld [vmem:[%s4] sm:$0x3]
  %v265 = vlaneseq
  %v266 = vshrl.u32 %v265, 7
  %v267 = vsub.s32 0, %v266
  %v268 = vrot.slane %v263, %v267
  %v269 = vlaneseq
  %v270 = vshrl.u32 %v269, 7
  %v271 = vsub.s32 1, %v270
  %v272 = vrot.slane %v263, %v271
  %v307 = vunpack.c.l.b16 %v198
  %v308 = vunpack.c.h.b16 %v198
  %v309 = vunpack.c.l.b16 %v199
  %v310 = vunpack.c.h.b16 %v199
  %v311 = vunpack.c.l.b16 %v200
  %v312 = vunpack.c.h.b16 %v200
  %v313 = vunpack.c.l.b16 %v201
  %v314 = vunpack.c.h.b16 %v201
  %v315 = vunpack.c.l.b16 %v202
  %v316 = vunpack.c.h.b16 %v202
  %v317 = vunpack.c.l.b16 %v203
  %v318 = vunpack.c.h.b16 %v203
  %v319 = vunpack.c.l.b16 %v204
  %v320 = vunpack.c.h.b16 %v204
  %v321 = vunpack.c.l.b16 %v205
  %v322 = vunpack.c.h.b16 %v205
  %v323 = vunpack.c.l.b16 %v206
  %v324 = vunpack.c.h.b16 %v206
  %v325 = vunpack.c.l.b16 %v207
  %v326 = vunpack.c.h.b16 %v207
  %v327 = vunpack.c.l.b16 %v208
  %v328 = vunpack.c.h.b16 %v208
  %v329 = vunpack.c.l.b16 %v209
  %v330 = vunpack.c.h.b16 %v209
  %v331 = vunpack.c.l.b16 %v210
  %v332 = vunpack.c.h.b16 %v210
  %v333 = vunpack.c.l.b16 %v211
  %v334 = vunpack.c.h.b16 %v211
  %v335 = vunpack.c.l.b16 %v212
  %v336 = vunpack.c.h.b16 %v212
  %v337 = vunpack.c.l.b16 %v213
  %v338 = vunpack.c.h.b16 %v213
  %v339 = vunpack.c.l.b16 %v214
  %v340 = vunpack.c.h.b16 %v214
  %v341 = vunpack.c.l.b16 %v215
  %v342 = vunpack.c.h.b16 %v215
  %v343 = vunpack.c.l.b16 %v216
  %v344 = vunpack.c.h.b16 %v216
  %v345 = vunpack.c.l.b16 %v217
  %v346 = vunpack.c.h.b16 %v217
  %v347 = vunpack.c.l.b16 %v218
  %v348 = vunpack.c.h.b16 %v218
  %v349 = vunpack.c.l.b16 %v219
  %v350 = vunpack.c.h.b16 %v219
  %v351 = vunpack.c.l.b16 %v220
  %v352 = vunpack.c.h.b16 %v220
  %v353 = vunpack.c.l.b16 %v221
  %v354 = vunpack.c.h.b16 %v221
  %v355 = vunpack.c.l.b16 %v222
  %v356 = vunpack.c.h.b16 %v222
  %v357 = vunpack.c.l.b16 %v223
  %v358 = vunpack.c.h.b16 %v223
  %v359 = vunpack.c.l.b16 %v224
  %v360 = vunpack.c.h.b16 %v224
  %v361 = vunpack.c.l.b16 %v225
  %v362 = vunpack.c.h.b16 %v225
  %v363 = vunpack.c.l.b16 %v226
  %v364 = vunpack.c.h.b16 %v226
  %v365 = vunpack.c.l.b16 %v227
  %v366 = vunpack.c.h.b16 %v227
  %v367 = vunpack.c.l.b16 %v228
  %v368 = vunpack.c.h.b16 %v228
  %v369 = vunpack.c.l.b16 %v229
  %v370 = vunpack.c.h.b16 %v229
  %v371 = vpack.c.b16 %v309, %v307
  %v372 = vpack.c.b16 %v310, %v308
  %v373 = vpack.c.b16 %v313, %v311
  %v374 = vpack.c.b16 %v314, %v312
  %v375 = vpack.c.b16 %v317, %v315
  %v376 = vpack.c.b16 %v318, %v316
  %v377 = vpack.c.b16 %v321, %v319
  %v378 = vpack.c.b16 %v322, %v320
  %v379 = vpack.c.b16 %v325, %v323
  %v380 = vpack.c.b16 %v326, %v324
  %v381 = vpack.c.b16 %v329, %v327
  %v382 = vpack.c.b16 %v330, %v328
  %v383 = vpack.c.b16 %v333, %v331
  %v384 = vpack.c.b16 %v334, %v332
  %v385 = vpack.c.b16 %v337, %v335
  %v386 = vpack.c.b16 %v338, %v336
  %v387 = vpack.c.b16 %v341, %v339
  %v388 = vpack.c.b16 %v342, %v340
  %v389 = vpack.c.b16 %v345, %v343
  %v390 = vpack.c.b16 %v346, %v344
  %v391 = vpack.c.b16 %v349, %v347
  %v392 = vpack.c.b16 %v350, %v348
  %v393 = vpack.c.b16 %v353, %v351
  %v394 = vpack.c.b16 %v354, %v352
  %v395 = vpack.c.b16 %v357, %v355
  %v396 = vpack.c.b16 %v358, %v356
  %v397 = vpack.c.b16 %v361, %v359
  %v398 = vpack.c.b16 %v362, %v360
  %v399 = vpack.c.b16 %v365, %v363
  %v400 = vpack.c.b16 %v366, %v364
  %v401 = vpack.c.b16 %v369, %v367
  %v402 = vpack.c.b16 %v370, %v368
  %435 = vmatprep.subr.bf16.mxu0 %v386
  %436 = vmatpush1.bf16.msra.mxu0 %v385
  %437 = vmatprep.subr.bf16.mxu0 %v384
  %438 = vmatpush1.bf16.msra.mxu0 %v383
  %439 = vmatprep.subr.bf16.mxu0 %v382
  %440 = vmatpush1.bf16.msra.mxu0 %v381
  %441 = vmatprep.subr.bf16.mxu0 %v380
  %442 = vmatpush1.bf16.msra.mxu0 %v379
  %443 = vmatprep.subr.bf16.mxu0 %v378
  %444 = vmatpush1.bf16.msra.mxu0 %v377
  %445 = vmatprep.subr.bf16.mxu0 %v376
  %446 = vmatpush1.bf16.msra.mxu0 %v375
  %447 = vmatprep.subr.bf16.mxu0 %v374
  %448 = vmatpush1.bf16.msra.mxu0 %v373
  %449 = vmatprep.subr.bf16.mxu0 %v372
  %450 = vmatpush1.bf16.msra.mxu0 %v371
  %451 = vmatprep.subr.bf16.mxu0 %v402
  %452 = vmatpush2.bf16.msra.mxu0 %v401
  %453 = vmatprep.subr.bf16.mxu0 %v400
  %454 = vmatpush2.bf16.msra.mxu0 %v399
  %455 = vmatprep.subr.bf16.mxu0 %v398
  %456 = vmatpush2.bf16.msra.mxu0 %v397
  %457 = vmatprep.subr.bf16.mxu0 %v396
  %458 = vmatpush2.bf16.msra.mxu0 %v395
  %459 = vmatprep.subr.bf16.mxu0 %v394
  %460 = vmatpush2.bf16.msra.mxu0 %v393
  %461 = vmatprep.subr.bf16.mxu0 %v392
  %462 = vmatpush2.bf16.msra.mxu0 %v391
  %463 = vmatprep.subr.bf16.mxu0 %v390
  %464 = vmatpush2.bf16.msra.mxu0 %v389
  %465 = vmatprep.subr.bf16.mxu0 %v388
  %466 = vmatpush2.bf16.msra.mxu0 %v387
  %467 = vmatprep.mubr.bf16.mxu0 %v195
  %468 = vmatmul.mubr.bf16.gmra.mxu0 %v194
  %v469 = vpop.f32.mrf.mxu0
  %v470 = vadd.f32 %v268, %v469
  %v471 = vpop.f32.mrf.mxu0
  %v472 = vadd.f32 %v272, %v471
  %v473 = vpop.f32.mrf.mxu0
  %v474 = vpop.f32.mrf.mxu0
  %475 = vdwg.mxu0
  %v476 = vmax.f32 %v470, 0.0
  %v477 = vmax.f32 %v472, 0.0
  %s478 = scalar_lea.vmem %s4, 2
  %v479 = vld [vmem:[%s478] sm:$0x3]
  %v481 = vlaneseq
  %v482 = vshrl.u32 %v481, 7
  %v483 = vsub.s32 0, %v482
  %v484 = vrot.slane %v479, %v483
  %v485 = vlaneseq
  %v486 = vshrl.u32 %v485, 7
  %v487 = vsub.s32 1, %v486
  %v488 = vrot.slane %v479, %v487
  %v523 = vunpack.c.l.b16 %v231
  %v524 = vunpack.c.h.b16 %v231
  %v525 = vunpack.c.l.b16 %v232
  %v526 = vunpack.c.h.b16 %v232
  %v527 = vunpack.c.l.b16 %v233
  %v528 = vunpack.c.h.b16 %v233
  %v529 = vunpack.c.l.b16 %v234
  %v530 = vunpack.c.h.b16 %v234
  %v531 = vunpack.c.l.b16 %v235
  %v532 = vunpack.c.h.b16 %v235
  %v533 = vunpack.c.l.b16 %v236
  %v534 = vunpack.c.h.b16 %v236
  %v535 = vunpack.c.l.b16 %v237
  %v536 = vunpack.c.h.b16 %v237
  %v537 = vunpack.c.l.b16 %v238
  %v538 = vunpack.c.h.b16 %v238
  %v539 = vunpack.c.l.b16 %v239
  %v540 = vunpack.c.h.b16 %v239
  %v541 = vunpack.c.l.b16 %v240
  %v542 = vunpack.c.h.b16 %v240
  %v543 = vunpack.c.l.b16 %v241
  %v544 = vunpack.c.h.b16 %v241
  %v545 = vunpack.c.l.b16 %v242
  %v546 = vunpack.c.h.b16 %v242
  %v547 = vunpack.c.l.b16 %v243
  %v548 = vunpack.c.h.b16 %v243
  %v549 = vunpack.c.l.b16 %v244
  %v550 = vunpack.c.h.b16 %v244
  %v551 = vunpack.c.l.b16 %v245
  %v552 = vunpack.c.h.b16 %v245
  %v553 = vunpack.c.l.b16 %v246
  %v554 = vunpack.c.h.b16 %v246
  %v555 = vunpack.c.l.b16 %v247
  %v556 = vunpack.c.h.b16 %v247
  %v557 = vunpack.c.l.b16 %v248
  %v558 = vunpack.c.h.b16 %v248
  %v559 = vunpack.c.l.b16 %v249
  %v560 = vunpack.c.h.b16 %v249
  %v561 = vunpack.c.l.b16 %v250
  %v562 = vunpack.c.h.b16 %v250
  %v563 = vunpack.c.l.b16 %v251
  %v564 = vunpack.c.h.b16 %v251
  %v565 = vunpack.c.l.b16 %v252
  %v566 = vunpack.c.h.b16 %v252
  %v567 = vunpack.c.l.b16 %v253
  %v568 = vunpack.c.h.b16 %v253
  %v569 = vunpack.c.l.b16 %v254
  %v570 = vunpack.c.h.b16 %v254
  %v571 = vunpack.c.l.b16 %v255
  %v572 = vunpack.c.h.b16 %v255
  %v573 = vunpack.c.l.b16 %v256
  %v574 = vunpack.c.h.b16 %v256
  %v575 = vunpack.c.l.b16 %v257
  %v576 = vunpack.c.h.b16 %v257
  %v577 = vunpack.c.l.b16 %v258
  %v578 = vunpack.c.h.b16 %v258
  %v579 = vunpack.c.l.b16 %v259
  %v580 = vunpack.c.h.b16 %v259
  %v581 = vunpack.c.l.b16 %v260
  %v582 = vunpack.c.h.b16 %v260
  %v583 = vunpack.c.l.b16 %v261
  %v584 = vunpack.c.h.b16 %v261
  %v585 = vunpack.c.l.b16 %v262
  %v586 = vunpack.c.h.b16 %v262
  %v587 = vpack.c.b16 %v525, %v523
  %v588 = vpack.c.b16 %v526, %v524
  %v589 = vpack.c.b16 %v529, %v527
  %v590 = vpack.c.b16 %v530, %v528
  %v591 = vpack.c.b16 %v533, %v531
  %v592 = vpack.c.b16 %v534, %v532
  %v593 = vpack.c.b16 %v537, %v535
  %v594 = vpack.c.b16 %v538, %v536
  %v595 = vpack.c.b16 %v541, %v539
  %v596 = vpack.c.b16 %v542, %v540
  %v597 = vpack.c.b16 %v545, %v543
  %v598 = vpack.c.b16 %v546, %v544
  %v599 = vpack.c.b16 %v549, %v547
  %v600 = vpack.c.b16 %v550, %v548
  %v601 = vpack.c.b16 %v553, %v551
  %v602 = vpack.c.b16 %v554, %v552
  %v603 = vpack.c.b16 %v557, %v555
  %v604 = vpack.c.b16 %v558, %v556
  %v605 = vpack.c.b16 %v561, %v559
  %v606 = vpack.c.b16 %v562, %v560
  %v607 = vpack.c.b16 %v565, %v563
  %v608 = vpack.c.b16 %v566, %v564
  %v609 = vpack.c.b16 %v569, %v567
  %v610 = vpack.c.b16 %v570, %v568
  %v611 = vpack.c.b16 %v573, %v571
  %v612 = vpack.c.b16 %v574, %v572
  %v613 = vpack.c.b16 %v577, %v575
  %v614 = vpack.c.b16 %v578, %v576
  %v615 = vpack.c.b16 %v581, %v579
  %v616 = vpack.c.b16 %v582, %v580
  %v617 = vpack.c.b16 %v585, %v583
  %v618 = vpack.c.b16 %v586, %v584
  %651 = vmatprep.subr.bf16.mxu0 %v602
  %652 = vmatpush1.bf16.msra.mxu0 %v601
  %653 = vmatprep.subr.bf16.mxu0 %v600
  %654 = vmatpush1.bf16.msra.mxu0 %v599
  %655 = vmatprep.subr.bf16.mxu0 %v598
  %656 = vmatpush1.bf16.msra.mxu0 %v597
  %657 = vmatprep.subr.bf16.mxu0 %v596
  %658 = vmatpush1.bf16.msra.mxu0 %v595
  %659 = vmatprep.subr.bf16.mxu0 %v594
  %660 = vmatpush1.bf16.msra.mxu0 %v593
  %661 = vmatprep.subr.bf16.mxu0 %v592
  %662 = vmatpush1.bf16.msra.mxu0 %v591
  %663 = vmatprep.subr.bf16.mxu0 %v590
  %664 = vmatpush1.bf16.msra.mxu0 %v589
  %665 = vmatprep.subr.bf16.mxu0 %v588
  %666 = vmatpush1.bf16.msra.mxu0 %v587
  %667 = vmatprep.subr.bf16.mxu0 %v618
  %668 = vmatpush2.bf16.msra.mxu0 %v617
  %669 = vmatprep.subr.bf16.mxu0 %v616
  %670 = vmatpush2.bf16.msra.mxu0 %v615
  %671 = vmatprep.subr.bf16.mxu0 %v614
  %672 = vmatpush2.bf16.msra.mxu0 %v613
  %673 = vmatprep.subr.bf16.mxu0 %v612
  %674 = vmatpush2.bf16.msra.mxu0 %v611
  %675 = vmatprep.subr.bf16.mxu0 %v610
  %676 = vmatpush2.bf16.msra.mxu0 %v609
  %677 = vmatprep.subr.bf16.mxu0 %v608
  %678 = vmatpush2.bf16.msra.mxu0 %v607
  %679 = vmatprep.subr.bf16.mxu0 %v606
  %680 = vmatpush2.bf16.msra.mxu0 %v605
  %681 = vmatprep.subr.bf16.mxu0 %v604
  %682 = vmatpush2.bf16.msra.mxu0 %v603
  %683 = vmatprep.mubr.bf16.mxu0 %v197
  %684 = vmatmul.mubr.bf16.gmra.mxu0 %v196
  %v685 = vpop.f32.mrf.mxu0
  %v686 = vadd.f32 %v484, %v685
  %v687 = vpop.f32.mrf.mxu0
  %v688 = vadd.f32 %v488, %v687
  %v689 = vpop.f32.mrf.mxu0
  %v690 = vpop.f32.mrf.mxu0
  %691 = vdwg.mxu0
  %v692 = vmax.f32 %v686, 0.0
  %v693 = vmax.f32 %v688, 0.0
  %v694 = vpack.c.bf16 %v476, %v476
  %v695 = vpack.c.bf16 %v477, %v477
  %v696 = vpack.c.bf16 %v692, %v692
  %v697 = vpack.c.bf16 %v693, %v693
  %v698 = vld [vmem:[%s5] sm:$0xf]
  %v699 = vld [vmem:[%s5 + $0x4] sm:$0xf]
  %v700 = vld [vmem:[%s5 + $0x8] sm:$0xf]
  %v701 = vld [vmem:[%s5 + $0xc] sm:$0xf]
  %v702 = vld [vmem:[%s5 + $0x10] sm:$0xf]
  %v703 = vld [vmem:[%s5 + $0x14] sm:$0xf]
  %v704 = vld [vmem:[%s5 + $0x18] sm:$0xf]
  %v705 = vld [vmem:[%s5 + $0x1c] sm:$0xf]
  %v706 = vld [vmem:[%s5 + $0x20] sm:$0xf]
  %v707 = vld [vmem:[%s5 + $0x24] sm:$0xf]
  %v708 = vld [vmem:[%s5 + $0x28] sm:$0xf]
  %v709 = vld [vmem:[%s5 + $0x2c] sm:$0xf]
  %v710 = vld [vmem:[%s5 + $0x30] sm:$0xf]
  %v711 = vld [vmem:[%s5 + $0x34] sm:$0xf]
  %v712 = vld [vmem:[%s5 + $0x38] sm:$0xf]
  %v713 = vld [vmem:[%s5 + $0x3c] sm:$0xf]
  %v714 = vld [vmem:[%s5 + $0x40] sm:$0xf]
  %v715 = vld [vmem:[%s5 + $0x44] sm:$0xf]
  %v716 = vld [vmem:[%s5 + $0x48] sm:$0xf]
  %v717 = vld [vmem:[%s5 + $0x4c] sm:$0xf]
  %v718 = vld [vmem:[%s5 + $0x50] sm:$0xf]
  %v719 = vld [vmem:[%s5 + $0x54] sm:$0xf]
  %v720 = vld [vmem:[%s5 + $0x58] sm:$0xf]
  %s721 = scalar_lea.vmem %s5, 92
  %v722 = vld [vmem:[%s721] sm:$0xf]
  %v723 = vld [vmem:[%s721 + $0x4] sm:$0xf]
  %v724 = vld [vmem:[%s721 + $0x8] sm:$0xf]
  %v725 = vld [vmem:[%s721 + $0xc] sm:$0xf]
  %v726 = vld [vmem:[%s721 + $0x10] sm:$0xf]
  %v727 = vld [vmem:[%s721 + $0x14] sm:$0xf]
  %v728 = vld [vmem:[%s721 + $0x18] sm:$0xf]
  %v729 = vld [vmem:[%s721 + $0x1c] sm:$0xf]
  %v730 = vld [vmem:[%s721 + $0x20] sm:$0xf]
  %v731 = vld [vmem:[%s721 + $0x24] sm:$0xf]
  %v732 = vld [vmem:[%s721 + $0x28] sm:$0xf]
  %v733 = vld [vmem:[%s721 + $0x2c] sm:$0xf]
  %v734 = vld [vmem:[%s721 + $0x30] sm:$0xf]
  %v735 = vld [vmem:[%s721 + $0x34] sm:$0xf]
  %v736 = vld [vmem:[%s721 + $0x38] sm:$0xf]
  %v737 = vld [vmem:[%s721 + $0x3c] sm:$0xf]
  %v738 = vld [vmem:[%s721 + $0x40] sm:$0xf]
  %v739 = vld [vmem:[%s721 + $0x44] sm:$0xf]
  %v740 = vld [vmem:[%s721 + $0x48] sm:$0xf]
  %v741 = vld [vmem:[%s721 + $0x4c] sm:$0xf]
  %v742 = vld [vmem:[%s721 + $0x50] sm:$0xf]
  %v743 = vld [vmem:[%s721 + $0x54] sm:$0xf]
  %v744 = vld [vmem:[%s721 + $0x58] sm:$0xf]
  %v745 = vld [vmem:[%s6] sm:$0x1]
  %v747 = vlaneseq
  %v748 = vshrl.u32 %v747, 7
  %v749 = vsub.s32 0, %v748
  %v750 = vrot.slane %v745, %v749
  %v775 = vunpack.c.l.b16 %v698
  %v776 = vunpack.c.l.b16 %v699
  %v777 = vunpack.c.l.b16 %v700
  %v778 = vunpack.c.l.b16 %v701
  %v779 = vunpack.c.l.b16 %v702
  %v780 = vunpack.c.l.b16 %v703
  %v781 = vunpack.c.l.b16 %v704
  %v782 = vunpack.c.l.b16 %v705
  %v783 = vunpack.c.l.b16 %v706
  %v784 = vunpack.c.l.b16 %v707
  %v785 = vunpack.c.l.b16 %v708
  %v786 = vunpack.c.l.b16 %v709
  %v787 = vunpack.c.l.b16 %v710
  %v788 = vunpack.c.l.b16 %v711
  %v789 = vunpack.c.l.b16 %v712
  %v790 = vunpack.c.l.b16 %v713
  %v791 = vunpack.c.l.b16 %v714
  %v792 = vunpack.c.l.b16 %v715
  %v793 = vunpack.c.l.b16 %v716
  %v794 = vunpack.c.l.b16 %v717
  %v795 = vunpack.c.l.b16 %v718
  %v796 = vunpack.c.l.b16 %v719
  %v797 = vunpack.c.l.b16 %v720
  %v798 = vpack.c.b16 %v776, %v775
  %v799 = vpack.c.b16 %v778, %v777
  %v800 = vpack.c.b16 %v780, %v779
  %v801 = vpack.c.b16 %v782, %v781
  %v802 = vpack.c.b16 %v784, %v783
  %v803 = vpack.c.b16 %v786, %v785
  %v804 = vpack.c.b16 %v788, %v787
  %v805 = vpack.c.b16 %v790, %v789
  %v806 = vpack.c.b16 %v792, %v791
  %v807 = vpack.c.b16 %v794, %v793
  %v808 = vpack.c.b16 %v796, %v795
  %v809 = vpack.c.b16 %v797, %v797
  %vm821 = vcmask 457728
  %v823 = vsel %vm821, %v695, 0
  %vm825 = vcmask 1043456
  %v827 = vsel %vm825, %v809, 0
  %829 = vmatprep.subr.bf16.mxu0 0
  %830 = vmatpush1.bf16.msra.mxu0 %v805
  %831 = vmatprep.subr.bf16.mxu0 0
  %832 = vmatpush1.bf16.msra.mxu0 %v804
  %833 = vmatprep.subr.bf16.mxu0 0
  %834 = vmatpush1.bf16.msra.mxu0 %v803
  %835 = vmatprep.subr.bf16.mxu0 0
  %836 = vmatpush1.bf16.msra.mxu0 %v802
  %837 = vmatprep.subr.bf16.mxu0 0
  %838 = vmatpush1.bf16.msra.mxu0 %v801
  %839 = vmatprep.subr.bf16.mxu0 0
  %840 = vmatpush1.bf16.msra.mxu0 %v800
  %841 = vmatprep.subr.bf16.mxu0 0
  %842 = vmatpush1.bf16.msra.mxu0 %v799
  %843 = vmatprep.subr.bf16.mxu0 0
  %844 = vmatpush1.bf16.msra.mxu0 %v798
  %845 = vmatprep.subr.bf16.mxu0 0
  %846 = vmatpush2.bf16.msra.mxu0 0
  %847 = vmatprep.subr.bf16.mxu0 0
  %848 = vmatpush2.bf16.msra.mxu0 0
  %849 = vmatprep.subr.bf16.mxu0 0
  %850 = vmatpush2.bf16.msra.mxu0 0
  %851 = vmatprep.subr.bf16.mxu0 0
  %852 = vmatpush2.bf16.msra.mxu0 0
  %853 = vmatprep.subr.bf16.mxu0 0
  %854 = vmatpush2.bf16.msra.mxu0 %v827
  %855 = vmatprep.subr.bf16.mxu0 0
  %856 = vmatpush2.bf16.msra.mxu0 %v808
  %857 = vmatprep.subr.bf16.mxu0 0
  %858 = vmatpush2.bf16.msra.mxu0 %v807
  %859 = vmatprep.subr.bf16.mxu0 0
  %860 = vmatpush2.bf16.msra.mxu0 %v806
  %861 = vmatprep.mubr.bf16.mxu0 %v823
  %862 = vmatmul.mubr.bf16.gmra.mxu0 %v694
  %v863 = vpop.f32.mrf.mxu0
  %v864 = vadd.f32 %v750, %v863
  %v865 = vpop.f32.mrf.mxu0
  %v866 = vpop.f32.mrf.mxu0
  %v867 = vpop.f32.mrf.mxu0
  %868 = vdwg.mxu0
  %v869 = vmax.f32 %v864, 0.0
  %s870 = scalar_lea.vmem %s6, 1
  %v871 = vld [vmem:[%s870] sm:$0x1]
  %v873 = vlaneseq
  %v874 = vshrl.u32 %v873, 7
  %v875 = vsub.s32 0, %v874
  %v876 = vrot.slane %v871, %v875
  %v901 = vunpack.c.l.b16 %v722
  %v902 = vunpack.c.l.b16 %v723
  %v903 = vunpack.c.l.b16 %v724
  %v904 = vunpack.c.l.b16 %v725
  %v905 = vunpack.c.l.b16 %v726
  %v906 = vunpack.c.l.b16 %v727
  %v907 = vunpack.c.l.b16 %v728
  %v908 = vunpack.c.l.b16 %v729
  %v909 = vunpack.c.l.b16 %v730
  %v910 = vunpack.c.l.b16 %v731
  %v911 = vunpack.c.l.b16 %v732
  %v912 = vunpack.c.l.b16 %v733
  %v913 = vunpack.c.l.b16 %v734
  %v914 = vunpack.c.l.b16 %v735
  %v915 = vunpack.c.l.b16 %v736
  %v916 = vunpack.c.l.b16 %v737
  %v917 = vunpack.c.l.b16 %v738
  %v918 = vunpack.c.l.b16 %v739
  %v919 = vunpack.c.l.b16 %v740
  %v920 = vunpack.c.l.b16 %v741
  %v921 = vunpack.c.l.b16 %v742
  %v922 = vunpack.c.l.b16 %v743
  %v923 = vunpack.c.l.b16 %v744
  %v924 = vpack.c.b16 %v902, %v901
  %v925 = vpack.c.b16 %v904, %v903
  %v926 = vpack.c.b16 %v906, %v905
  %v927 = vpack.c.b16 %v908, %v907
  %v928 = vpack.c.b16 %v910, %v909
  %v929 = vpack.c.b16 %v912, %v911
  %v930 = vpack.c.b16 %v914, %v913
  %v931 = vpack.c.b16 %v916, %v915
  %v932 = vpack.c.b16 %v918, %v917
  %v933 = vpack.c.b16 %v920, %v919
  %v934 = vpack.c.b16 %v922, %v921
  %v935 = vpack.c.b16 %v923, %v923
  %v948 = vsel %vm821, %v697, 0
  %v951 = vsel %vm825, %v935, 0
  %953 = vmatprep.subr.bf16.mxu0 0
  %954 = vmatpush1.bf16.msra.mxu0 %v931
  %955 = vmatprep.subr.bf16.mxu0 0
  %956 = vmatpush1.bf16.msra.mxu0 %v930
  %957 = vmatprep.subr.bf16.mxu0 0
  %958 = vmatpush1.bf16.msra.mxu0 %v929
  %959 = vmatprep.subr.bf16.mxu0 0
  %960 = vmatpush1.bf16.msra.mxu0 %v928
  %961 = vmatprep.subr.bf16.mxu0 0
  %962 = vmatpush1.bf16.msra.mxu0 %v927
  %963 = vmatprep.subr.bf16.mxu0 0
  %964 = vmatpush1.bf16.msra.mxu0 %v926
  %965 = vmatprep.subr.bf16.mxu0 0
  %966 = vmatpush1.bf16.msra.mxu0 %v925
  %967 = vmatprep.subr.bf16.mxu0 0
  %968 = vmatpush1.bf16.msra.mxu0 %v924
  %969 = vmatprep.subr.bf16.mxu0 0
  %970 = vmatpush2.bf16.msra.mxu0 0
  %971 = vmatprep.subr.bf16.mxu0 0
  %972 = vmatpush2.bf16.msra.mxu0 0
  %973 = vmatprep.subr.bf16.mxu0 0
  %974 = vmatpush2.bf16.msra.mxu0 0
  %975 = vmatprep.subr.bf16.mxu0 0
  %976 = vmatpush2.bf16.msra.mxu0 0
  %977 = vmatprep.subr.bf16.mxu0 0
  %978 = vmatpush2.bf16.msra.mxu0 %v951
  %979 = vmatprep.subr.bf16.mxu0 0
  %980 = vmatpush2.bf16.msra.mxu0 %v934
  %981 = vmatprep.subr.bf16.mxu0 0
  %982 = vmatpush2.bf16.msra.mxu0 %v933
  %983 = vmatprep.subr.bf16.mxu0 0
  %984 = vmatpush2.bf16.msra.mxu0 %v932
  %985 = vmatprep.mubr.bf16.mxu0 %v948
  %986 = vmatmul.mubr.bf16.gmra.mxu0 %v696
  %v987 = vpop.f32.mrf.mxu0
  %v988 = vadd.f32 %v876, %v987
  %v989 = vpop.f32.mrf.mxu0
  %v990 = vpop.f32.mrf.mxu0
  %v991 = vpop.f32.mrf.mxu0
  %992 = vdwg.mxu0
  %v993 = vmax.f32 %v988, 0.0
  %v994 = vpack.c.bf16 %v869, %v869
  %v995 = vpack.c.bf16 %v993, %v993
  %v996 = vld [vmem:[%s7] sm:$0xf]
  %v997 = vld [vmem:[%s7 + $0x4] sm:$0xf]
  %v998 = vld [vmem:[%s7 + $0x8] sm:$0xf]
  %v999 = vld [vmem:[%s7 + $0xc] sm:$0xf]
  %v1000 = vld [vmem:[%s7 + $0x10] sm:$0xf]
  %v1001 = vld [vmem:[%s7 + $0x14] sm:$0xf]
  %v1002 = vld [vmem:[%s7 + $0x18] sm:$0xf]
  %v1003 = vld [vmem:[%s7 + $0x1c] sm:$0xf]
  %v1004 = vld [vmem:[%s7 + $0x20] sm:$0xf]
  %v1005 = vld [vmem:[%s7 + $0x24] sm:$0xf]
  %v1006 = vld [vmem:[%s7 + $0x28] sm:$0xf]
  %v1007 = vld [vmem:[%s7 + $0x2c] sm:$0xf]
  %v1008 = vld [vmem:[%s7 + $0x30] sm:$0xf]
  %v1009 = vld [vmem:[%s7 + $0x34] sm:$0xf]
  %v1010 = vld [vmem:[%s7 + $0x38] sm:$0xf]
  %v1011 = vld [vmem:[%s7 + $0x3c] sm:$0xf]
  %s1012 = scalar_lea.vmem %s7, 64
  %v1013 = vld [vmem:[%s1012] sm:$0xf]
  %v1014 = vld [vmem:[%s1012 + $0x4] sm:$0xf]
  %v1015 = vld [vmem:[%s1012 + $0x8] sm:$0xf]
  %v1016 = vld [vmem:[%s1012 + $0xc] sm:$0xf]
  %v1017 = vld [vmem:[%s1012 + $0x10] sm:$0xf]
  %v1018 = vld [vmem:[%s1012 + $0x14] sm:$0xf]
  %v1019 = vld [vmem:[%s1012 + $0x18] sm:$0xf]
  %v1020 = vld [vmem:[%s1012 + $0x1c] sm:$0xf]
  %v1021 = vld [vmem:[%s1012 + $0x20] sm:$0xf]
  %v1022 = vld [vmem:[%s1012 + $0x24] sm:$0xf]
  %v1023 = vld [vmem:[%s1012 + $0x28] sm:$0xf]
  %v1024 = vld [vmem:[%s1012 + $0x2c] sm:$0xf]
  %v1025 = vld [vmem:[%s1012 + $0x30] sm:$0xf]
  %v1026 = vld [vmem:[%s1012 + $0x34] sm:$0xf]
  %v1027 = vld [vmem:[%s1012 + $0x38] sm:$0xf]
  %v1028 = vld [vmem:[%s1012 + $0x3c] sm:$0xf]
  %v1029 = vld [vmem:[%s8] sm:$0x1]
  %v1031 = vlaneseq
  %v1032 = vshrl.u32 %v1031, 7
  %v1033 = vsub.s32 0, %v1032
  %v1034 = vrot.slane %v1029, %v1033
  %v1052 = vunpack.c.l.b16 %v996
  %v1053 = vunpack.c.l.b16 %v997
  %v1054 = vunpack.c.l.b16 %v998
  %v1055 = vunpack.c.l.b16 %v999
  %v1056 = vunpack.c.l.b16 %v1000
  %v1057 = vunpack.c.l.b16 %v1001
  %v1058 = vunpack.c.l.b16 %v1002
  %v1059 = vunpack.c.l.b16 %v1003
  %v1060 = vunpack.c.l.b16 %v1004
  %v1061 = vunpack.c.l.b16 %v1005
  %v1062 = vunpack.c.l.b16 %v1006
  %v1063 = vunpack.c.l.b16 %v1007
  %v1064 = vunpack.c.l.b16 %v1008
  %v1065 = vunpack.c.l.b16 %v1009
  %v1066 = vunpack.c.l.b16 %v1010
  %v1067 = vunpack.c.l.b16 %v1011
  %v1068 = vpack.c.b16 %v1053, %v1052
  %v1069 = vpack.c.b16 %v1055, %v1054
  %v1070 = vpack.c.b16 %v1057, %v1056
  %v1071 = vpack.c.b16 %v1059, %v1058
  %v1072 = vpack.c.b16 %v1061, %v1060
  %v1073 = vpack.c.b16 %v1063, %v1062
  %v1074 = vpack.c.b16 %v1065, %v1064
  %v1075 = vpack.c.b16 %v1067, %v1066
  %1084 = vmatprep.subr.bf16.mxu0 0
  %1085 = vmatpush1.bf16.msra.mxu0 %v1075
  %1086 = vmatprep.subr.bf16.mxu0 0
  %1087 = vmatpush1.bf16.msra.mxu0 %v1074
  %1088 = vmatprep.subr.bf16.mxu0 0
  %1089 = vmatpush1.bf16.msra.mxu0 %v1073
  %1090 = vmatprep.subr.bf16.mxu0 0
  %1091 = vmatpush1.bf16.msra.mxu0 %v1072
  %1092 = vmatprep.subr.bf16.mxu0 0
  %1093 = vmatpush1.bf16.msra.mxu0 %v1071
  %1094 = vmatprep.subr.bf16.mxu0 0
  %1095 = vmatpush1.bf16.msra.mxu0 %v1070
  %1096 = vmatprep.subr.bf16.mxu0 0
  %1097 = vmatpush1.bf16.msra.mxu0 %v1069
  %1098 = vmatprep.subr.bf16.mxu0 0
  %1099 = vmatpush1.bf16.msra.mxu0 %v1068
  %1100 = vmatprep.subr.bf16.mxu0 0
  %1101 = vmatpush2.bf16.msra.mxu0 0
  %1102 = vmatprep.subr.bf16.mxu0 0
  %1103 = vmatpush2.bf16.msra.mxu0 0
  %1104 = vmatprep.subr.bf16.mxu0 0
  %1105 = vmatpush2.bf16.msra.mxu0 0
  %1106 = vmatprep.subr.bf16.mxu0 0
  %1107 = vmatpush2.bf16.msra.mxu0 0
  %1108 = vmatprep.subr.bf16.mxu0 0
  %1109 = vmatpush2.bf16.msra.mxu0 0
  %1110 = vmatprep.subr.bf16.mxu0 0
  %1111 = vmatpush2.bf16.msra.mxu0 0
  %1112 = vmatprep.subr.bf16.mxu0 0
  %1113 = vmatpush2.bf16.msra.mxu0 0
  %1114 = vmatprep.subr.bf16.mxu0 0
  %1115 = vmatpush2.bf16.msra.mxu0 0
  %1116 = vmatprep.mubr.bf16.mxu0 0
  %1117 = vmatmul.mubr.bf16.gmra.mxu0 %v994
  %v1118 = vpop.f32.mrf.mxu0
  %v1119 = vadd.f32 %v1034, %v1118
  %v1120 = vpop.f32.mrf.mxu0
  %v1121 = vpop.f32.mrf.mxu0
  %v1122 = vpop.f32.mrf.mxu0
  %1123 = vdwg.mxu0
  %v1124 = vmax.f32 %v1119, 0.0
  %s1125 = scalar_lea.vmem %s8, 1
  %v1126 = vld [vmem:[%s1125] sm:$0x1]
  %v1128 = vlaneseq
  %v1129 = vshrl.u32 %v1128, 7
  %v1130 = vsub.s32 0, %v1129
  %v1131 = vrot.slane %v1126, %v1130
  %v1149 = vunpack.c.l.b16 %v1013
  %v1150 = vunpack.c.l.b16 %v1014
  %v1151 = vunpack.c.l.b16 %v1015
  %v1152 = vunpack.c.l.b16 %v1016
  %v1153 = vunpack.c.l.b16 %v1017
  %v1154 = vunpack.c.l.b16 %v1018
  %v1155 = vunpack.c.l.b16 %v1019
  %v1156 = vunpack.c.l.b16 %v1020
  %v1157 = vunpack.c.l.b16 %v1021
  %v1158 = vunpack.c.l.b16 %v1022
  %v1159 = vunpack.c.l.b16 %v1023
  %v1160 = vunpack.c.l.b16 %v1024
  %v1161 = vunpack.c.l.b16 %v1025
  %v1162 = vunpack.c.l.b16 %v1026
  %v1163 = vunpack.c.l.b16 %v1027
  %v1164 = vunpack.c.l.b16 %v1028
  %v1165 = vpack.c.b16 %v1150, %v1149
  %v1166 = vpack.c.b16 %v1152, %v1151
  %v1167 = vpack.c.b16 %v1154, %v1153
  %v1168 = vpack.c.b16 %v1156, %v1155
  %v1169 = vpack.c.b16 %v1158, %v1157
  %v1170 = vpack.c.b16 %v1160, %v1159
  %v1171 = vpack.c.b16 %v1162, %v1161
  %v1172 = vpack.c.b16 %v1164, %v1163
  %1181 = vmatprep.subr.bf16.mxu0 0
  %1182 = vmatpush1.bf16.msra.mxu0 %v1172
  %1183 = vmatprep.subr.bf16.mxu0 0
  %1184 = vmatpush1.bf16.msra.mxu0 %v1171
  %1185 = vmatprep.subr.bf16.mxu0 0
  %1186 = vmatpush1.bf16.msra.mxu0 %v1170
  %1187 = vmatprep.subr.bf16.mxu0 0
  %1188 = vmatpush1.bf16.msra.mxu0 %v1169
  %1189 = vmatprep.subr.bf16.mxu0 0
  %1190 = vmatpush1.bf16.msra.mxu0 %v1168
  %1191 = vmatprep.subr.bf16.mxu0 0
  %1192 = vmatpush1.bf16.msra.mxu0 %v1167
  %1193 = vmatprep.subr.bf16.mxu0 0
  %1194 = vmatpush1.bf16.msra.mxu0 %v1166
  %1195 = vmatprep.subr.bf16.mxu0 0
  %1196 = vmatpush1.bf16.msra.mxu0 %v1165
  %1197 = vmatprep.subr.bf16.mxu0 0
  %1198 = vmatpush2.bf16.msra.mxu0 0
  %1199 = vmatprep.subr.bf16.mxu0 0
  %1200 = vmatpush2.bf16.msra.mxu0 0
  %1201 = vmatprep.subr.bf16.mxu0 0
  %1202 = vmatpush2.bf16.msra.mxu0 0
  %1203 = vmatprep.subr.bf16.mxu0 0
  %1204 = vmatpush2.bf16.msra.mxu0 0
  %1205 = vmatprep.subr.bf16.mxu0 0
  %1206 = vmatpush2.bf16.msra.mxu0 0
  %1207 = vmatprep.subr.bf16.mxu0 0
  %1208 = vmatpush2.bf16.msra.mxu0 0
  %1209 = vmatprep.subr.bf16.mxu0 0
  %1210 = vmatpush2.bf16.msra.mxu0 0
  %1211 = vmatprep.subr.bf16.mxu0 0
  %1212 = vmatpush2.bf16.msra.mxu0 0
  %1213 = vmatprep.mubr.bf16.mxu0 0
  %1214 = vmatmul.mubr.bf16.gmra.mxu0 %v995
  %v1215 = vpop.f32.mrf.mxu0
  %v1216 = vadd.f32 %v1131, %v1215
  %v1217 = vpop.f32.mrf.mxu0
  %v1218 = vpop.f32.mrf.mxu0
  %v1219 = vpop.f32.mrf.mxu0
  %1220 = vdwg.mxu0
  %v1221 = vmax.f32 %v1216, 0.0
  %1223 = vrot.lane.b32.xlu0 %v1221, 64
  %v1224 = vpop.permute.xlu0 %1223
  %vm1226 = vcmask 523264
  %v1227 = vsel %vm1226, %v1124, %v1224
  %1228 = vst [vmem:[%s9] sm:$0xff] %v1227
  // Predicated region
  $region38: #{actor_critic_forward.1} parent=0 // pred_check
    _
  $region39: #{actor_critic_forward.1} parent=0 // pred_check_branch
    %1230 = sbr.rel (0) target = $region41
  $region40: #{actor_critic_forward.1} parent=0 // pred_region
    _
  $region41: #{actor_critic_forward.1} parent=0 // pred_fallthru
    _
  // Predicated region
  $region42: #{actor_critic_forward.1} parent=0 // pred_check
    _
  $region43: #{actor_critic_forward.1} parent=0 // pred_check_branch
    %1232 = sbr.rel (0) target = $region45
  $region44: #{actor_critic_forward.1} parent=0 // pred_region
    _
  $region45: #{actor_critic_forward.1} parent=0 // pred_fallthru
    _

</llo_original>
